<compile_context>
chip_gen: v7x
topology: tpu7x:2x2x1
jax: 0.10.0
libtpu: 0.0.40
codegen_flags: <defaults>
</compile_context>

<pallas_src>
import functools

import jax
import jax.numpy as jnp
from jax.experimental import pallas as pl
from jax.experimental.pallas import tpu as pltpu

_COORD_ROWS = 8  # (x, y, ones) padded to a full sublane group


def _make_kernel(inv_temperature: float):
    def kernel(x_ref, coords_ref, out_ref):
        # x_ref:      (T, HW)   tile of channel rows, original dtype
        # coords_ref: (8, HW)   rows = (x, y, 1, 0, 0, 0, 0, 0)
        # out_ref:    (8, T)    rows = (E[x], E[y], 1, 0, ...)
        logits = x_ref[...].astype(jnp.float32) * inv_temperature
        m = jnp.max(logits, axis=-1, keepdims=True)       # XLU cross-lane max
        e = jnp.exp(logits - m)                           # un-normalized softmax
        # (8, HW) · (T, HW)^T -> (8, T); rows 0..2 = [Σ e·x, Σ e·y, Σ e].
        acc = jax.lax.dot_general(
            coords_ref[...], e,
            dimension_numbers=(((1,), (1,)), ((), ())),
            preferred_element_type=jnp.float32,
        )
        # Exact reciprocal: output is only (8, T) elements, accuracy > speed here.
        inv_denom = pl.reciprocal(acc[2:3, :], approx=False)
        out_ref[...] = (acc * inv_denom).astype(out_ref.dtype)

    return kernel


def _get_img_coordinates(h: int, w: int, normalize: bool):
    """img_x varies along W, img_y varies along H; both shaped (H, W)."""
    if normalize:
        xr = jnp.linspace(-1.0, 1.0, w, dtype=jnp.float32)
        yr = jnp.linspace(-1.0, 1.0, h, dtype=jnp.float32)
    else:
        xr = jnp.arange(w, dtype=jnp.float32)
        yr = jnp.arange(h, dtype=jnp.float32)
    img_x = jnp.broadcast_to(xr[None, :], (h, w))
    img_y = jnp.broadcast_to(yr[:, None], (h, w))
    return img_x, img_y


def _round_up(a: int, b: int) -> int:
    return ((a + b - 1) // b) * b


def _choose_row_tile(nc: int, hw: int, itemsize: int) -> int:
    # Per tile-row VMEM: double-buffered input block + ~3 f32 temporaries
    # (logits, e, matmul staging).  12 MiB budget fits the default scoped
    # VMEM on every generation, so no vmem_limit_bytes flag is needed.
    bytes_per_row = hw * (2 * itemsize + 3 * 4)
    t = max(1, (12 << 20) // bytes_per_row)
    t = max(128, (t // 128) * 128)        # T % 128 == 0 -> lane-dense output stores
    t = min(t, 1024)
    t = min(t, _round_up(nc, 128))        # don't tile far past the available rows
    if nc >= 4 * 256:
        # keep >= 4 grid steps so the "parallel" axis can still shard across
        # v7x's two TensorCores and the pipeline has something to overlap.
        t = min(t, max(128, _round_up(pl.cdiv(nc, 4), 128)))
    return int(t)


@functools.partial(jax.jit, static_argnames=("temperature", "normalize"))
def spatial_soft_argmax(x, temperature: float = 1.0, normalize: bool = False):
    """x: (N, C, H, W) float array  ->  (N, C, 2) soft-argmax coordinates."""
    if temperature is None:
        temperature = 1.0
    n, c, h, w = x.shape
    nc, hw = n * c, h * w

    # glue: flatten rows (no pad, no dtype cast — kernel casts per-tile)
    x2 = x.reshape(nc, hw)

    # lane-dense coordinate matrix (8, HW): rows = (x, y, ones, zeros...)
    img_x, img_y = _get_img_coordinates(h, w, normalize)
    coords = jnp.zeros((_COORD_ROWS, hw), dtype=jnp.float32)
    coords = coords.at[0].set(img_x.reshape(hw))
    coords = coords.at[1].set(img_y.reshape(hw))
    coords = coords.at[2].set(jnp.ones((hw,), dtype=jnp.float32))

    T = _choose_row_tile(nc, hw, x2.dtype.itemsize)
    grid = pl.cdiv(nc, T)
    nc_p = grid * T  # only the tiny output is padded; input tail stays ragged

    kernel = _make_kernel(1.0 / float(temperature))

    out = pl.pallas_call(
        kernel,
        out_shape=jax.ShapeDtypeStruct((_COORD_ROWS, nc_p), jnp.float32),
        grid=(grid,),
        in_specs=[
            pl.BlockSpec((T, hw), lambda i: (i, 0)),            # channel-row tile
            pl.BlockSpec((_COORD_ROWS, hw), lambda i: (0, 0)),  # coords, resident
        ],
        out_specs=pl.BlockSpec((_COORD_ROWS, T), lambda i: (0, i)),
        compiler_params=pltpu.CompilerParams(
            dimension_semantics=("parallel",),
        ),
    )(x2, coords)

    # (8, nc_p) -> take (E[x], E[y]) rows, valid columns, back to (N, C, 2)
    return out[:2, :nc].T.reshape(n, c, 2)


def _reference(x, temperature=1.0, normalize=False):
    n, c, h, w = x.shape
    sm = jax.nn.softmax(x.reshape(n * c, h * w) / temperature, axis=1)
    sm = sm.reshape(n, c, h, w)
    img_x, img_y = _get_img_coordinates(h, w, normalize)
    coords = jnp.stack([img_x, img_y], axis=-1)            # (H, W, 2)
    return jnp.sum(sm[..., None] * coords[None, None], axis=(2, 3))


if __name__ == "__main__":
    key = jax.random.PRNGKey(0)
    N, C, H, W = 2, 4, 16, 16
    x = jax.random.normal(key, (N, C, H, W), dtype=jnp.float32)

    out = spatial_soft_argmax(x, temperature=1.0, normalize=False)
    out = jax.block_until_ready(out)
    assert out.shape == (N, C, 2), out.shape
    ref = _reference(x, temperature=1.0, normalize=False)
    assert jnp.allclose(out, ref, atol=2e-3, rtol=2e-3), (
        float(jnp.max(jnp.abs(out - ref)))
    )

    out2 = spatial_soft_argmax(x, temperature=0.5, normalize=True)
    out2 = jax.block_until_ready(out2)
    ref2 = _reference(x, temperature=0.5, normalize=True)
    assert jnp.allclose(out2, ref2, atol=2e-3, rtol=2e-3), (
        float(jnp.max(jnp.abs(out2 - ref2)))
    )

    print("KERNEL_OK")
</pallas_src>

<mosaic_0001>
module attributes {stable_mosaic.version = 11 : i64} {
  func.func @kernel(%arg0: i32, %arg1: memref<128x256xf32, #tpu.memory_space<vmem>>, %arg2: memref<8x256xf32, #tpu.memory_space<vmem>>, %arg3: memref<8x128xf32, #tpu.memory_space<vmem>>) attributes {dimension_semantics = [#tpu.dimension_semantics<parallel>], iteration_bounds = array<i64: 1>, scalar_prefetch = 0 : i64, scratch_operands = 0 : i64, tpu.core_type = #tpu.core_type<tc>, window_params = [{transform_indices = @transform_0, window_bounds = array<i64: 128, 256>}, {pipeline_mode = #tpu.pipeline_mode<synchronous>, transform_indices = @transform_1, window_bounds = array<i64: 8, 256>}, {transform_indices = @transform_2, window_bounds = array<i64: 8, 128>}]} {
    %c0 = arith.constant 0 : index
    %c0_0 = arith.constant 0 : index
    %0 = vector.load %arg1[%c0, %c0_0] : memref<128x256xf32, #tpu.memory_space<vmem>>, vector<128x256xf32>
    %cst = arith.constant 1.000000e+00 : f32
    %1 = vector.broadcast %cst : f32 to vector<128x256xf32>
    %2 = arith.mulf %0, %1 : vector<128x256xf32>
    %cst_1 = arith.constant dense<0xFF800000> : vector<128xf32>
    %3 = vector.multi_reduction <maximumf>, %2, %cst_1 [1] : vector<128x256xf32> to vector<128xf32>
    %4 = vector.shape_cast %3 : vector<128xf32> to vector<128x1xf32>
    %5 = vector.broadcast %4 : vector<128x1xf32> to vector<128x256xf32>
    %6 = arith.subf %2, %5 : vector<128x256xf32>
    %7 = math.exp %6 : vector<128x256xf32>
    %c0_2 = arith.constant 0 : index
    %c0_3 = arith.constant 0 : index
    %8 = vector.load %arg2[%c0_2, %c0_3] : memref<8x256xf32, #tpu.memory_space<vmem>>, vector<8x256xf32>
    %cst_4 = arith.constant dense<0.000000e+00> : vector<8x128xf32>
    %9 = tpu.matmul %8, %7, %cst_4 {dimension_numbers = #tpu.dot_dimension_numbers<[1], [1], [0], [0], [0, 0, 1, 0], [], []>} : vector<8x256xf32>, vector<128x256xf32>, vector<8x128xf32> -> vector<8x128xf32>
    %10 = vector.extract_strided_slice %9 {offsets = [2, 0], sizes = [1, 128], strides = [1, 1]} : vector<8x128xf32> to vector<1x128xf32>
    %11 = tpu.reciprocal %10 : vector<1x128xf32> -> vector<1x128xf32>
    %12 = vector.broadcast %11 : vector<1x128xf32> to vector<8x128xf32>
    %13 = arith.mulf %9, %12 : vector<8x128xf32>
    %c0_5 = arith.constant 0 : index
    %c0_6 = arith.constant 0 : index
    %14 = vector.load %arg3[%c0_5, %c0_6] : memref<8x128xf32, #tpu.memory_space<vmem>>, vector<8x128xf32>
    tpu.vector_store %arg3[%c0_5, %c0_6], %13 {strides = array<i32>} : memref<8x128xf32, #tpu.memory_space<vmem>>, vector<8x128xf32>,
    return
  }
  func.func @transform_0(%arg0: i32) -> (i32, i32) {
    %c0_i32 = arith.constant 0 : i32
    %c0_i32_0 = arith.constant 0 : i32
    return %arg0, %c0_i32 : i32, i32
  }
  func.func @transform_1(%arg0: i32) -> (i32, i32) {
    %c0_i32 = arith.constant 0 : i32
    %c0_i32_0 = arith.constant 0 : i32
    %c0_i32_1 = arith.constant 0 : i32
    return %c0_i32, %c0_i32_0 : i32, i32
  }
  func.func @transform_2(%arg0: i32) -> (i32, i32) {
    %c0_i32 = arith.constant 0 : i32
    %c0_i32_0 = arith.constant 0 : i32
    return %c0_i32, %arg0 : i32, i32
  }
}

</mosaic_0001>

<llo_original>
// kernel: spatial_soft_argmax.1
$region0: #{spatial_soft_argmax.1}
  #allocation0 [shape = 'u32[]', space=smem, size = 0x4, offset = 0x4, fixed_abs, tag = 'smem constant byte address 0x4 - core index']
  #allocation1 [shape = 'u32[144,128]{1,0:T(1,128)}', space=vmem, size = 0x12000, scoped, tag = 'internal scratch']
  %s0 = inlined_call_operand.vmem [shape: f32[8,256], index: 0, kind: input, shape index: {}]
  %s1 = inlined_call_operand.vmem [shape: f32[8,256], index: 1, kind: input, shape index: {}]
  %s2 = inlined_call_operand.vmem [shape: f32[8,128], index: 2, kind: output, shape index: {}]
  %s3 = sld [smem:[#allocation0]]
  $region18: #{spatial_soft_argmax.1} parent=0
    _
  %s5 = ssub.s32 1, %s3
  %s6 = scalar_select 0, %s5, %s3
  // Predicated region
  $region2: #{spatial_soft_argmax.1} parent=0 // pred_check
    _
  $region3: #{spatial_soft_argmax.1} parent=0 // pred_check_branch
    %8 = sbr.rel (0) target = $region5
  $region4: #{spatial_soft_argmax.1} parent=0 // pred_region
    _
  $region5: #{spatial_soft_argmax.1} parent=0 // pred_fallthru
    _
  // Predicated region
  $region6: #{spatial_soft_argmax.1} parent=0 // pred_check
    _
  $region7: #{spatial_soft_argmax.1} parent=0 // pred_check_branch
    %10 = sbr.rel (0) target = $region9
  $region8: #{spatial_soft_argmax.1} parent=0 // pred_region
    _
  $region9: #{spatial_soft_argmax.1} parent=0 // pred_fallthru
    _
  %v11 = vld [vmem:[%s0] sm:$0xff]
  %v12 = vld [vmem:[%s0 + $0x8] sm:$0xff]
  %v13 = vld [vmem:[%s0 + $0x10] sm:$0xff]
  %v14 = vld [vmem:[%s0 + $0x18] sm:$0xff]
  %v15 = vld [vmem:[%s0 + $0x20] sm:$0xff]
  %v16 = vld [vmem:[%s0 + $0x28] sm:$0xff]
  %v17 = vld [vmem:[%s0 + $0x30] sm:$0xff]
  %v18 = vld [vmem:[%s0 + $0x38] sm:$0xff]
  %v19 = vld [vmem:[%s0 + $0x40] sm:$0xff]
  %v20 = vld [vmem:[%s0 + $0x48] sm:$0xff]
  %v21 = vld [vmem:[%s0 + $0x50] sm:$0xff]
  %v22 = vld [vmem:[%s0 + $0x58] sm:$0xff]
  %v23 = vld [vmem:[%s0 + $0x60] sm:$0xff]
  %v24 = vld [vmem:[%s0 + $0x68] sm:$0xff]
  %v25 = vld [vmem:[%s0 + $0x70] sm:$0xff]
  %v26 = vld [vmem:[%s0 + $0x78] sm:$0xff]
  %v27 = vld [vmem:[%s0 + $0x80] sm:$0xff]
  %v28 = vld [vmem:[%s0 + $0x88] sm:$0xff]
  %v29 = vld [vmem:[%s0 + $0x90] sm:$0xff]
  %v30 = vld [vmem:[%s0 + $0x98] sm:$0xff]
  %v31 = vld [vmem:[%s0 + $0xa0] sm:$0xff]
  %v32 = vld [vmem:[%s0 + $0xa8] sm:$0xff]
  %v33 = vld [vmem:[%s0 + $0xb0] sm:$0xff]
  %v34 = vld [vmem:[%s0 + $0xb8] sm:$0xff]
  %v35 = vld [vmem:[%s0 + $0xc0] sm:$0xff]
  %v36 = vld [vmem:[%s0 + $0xc8] sm:$0xff]
  %v37 = vld [vmem:[%s0 + $0xd0] sm:$0xff]
  %v38 = vld [vmem:[%s0 + $0xd8] sm:$0xff]
  %v39 = vld [vmem:[%s0 + $0xe0] sm:$0xff]
  %v40 = vld [vmem:[%s0 + $0xe8] sm:$0xff]
  %v41 = vld [vmem:[%s0 + $0xf0] sm:$0xff]
  %v42 = vld [vmem:[%s0 + $0xf8] sm:$0xff]
  %v43 = vmax.f32 %v11, %v12
  %44 = vmax.xlane.f32.xlu0 %v43
  %v45 = vpop.xlane.xlu0 %44
  %v46 = vmax.f32 %v13, %v14
  %47 = vmax.xlane.f32.xlu0 %v46
  %v48 = vpop.xlane.xlu0 %47
  %v49 = vmax.f32 %v15, %v16
  %50 = vmax.xlane.f32.xlu0 %v49
  %v51 = vpop.xlane.xlu0 %50
  %v52 = vmax.f32 %v17, %v18
  %53 = vmax.xlane.f32.xlu0 %v52
  %v54 = vpop.xlane.xlu0 %53
  %v55 = vmax.f32 %v19, %v20
  %56 = vmax.xlane.f32.xlu0 %v55
  %v57 = vpop.xlane.xlu0 %56
  %v58 = vmax.f32 %v21, %v22
  %59 = vmax.xlane.f32.xlu0 %v58
  %v60 = vpop.xlane.xlu0 %59
  %v61 = vmax.f32 %v23, %v24
  %62 = vmax.xlane.f32.xlu0 %v61
  %v63 = vpop.xlane.xlu0 %62
  %v64 = vmax.f32 %v25, %v26
  %65 = vmax.xlane.f32.xlu0 %v64
  %v66 = vpop.xlane.xlu0 %65
  %v67 = vmax.f32 %v27, %v28
  %68 = vmax.xlane.f32.xlu0 %v67
  %v69 = vpop.xlane.xlu0 %68
  %v70 = vmax.f32 %v29, %v30
  %71 = vmax.xlane.f32.xlu0 %v70
  %v72 = vpop.xlane.xlu0 %71
  %v73 = vmax.f32 %v31, %v32
  %74 = vmax.xlane.f32.xlu0 %v73
  %v75 = vpop.xlane.xlu0 %74
  %v76 = vmax.f32 %v33, %v34
  %77 = vmax.xlane.f32.xlu0 %v76
  %v78 = vpop.xlane.xlu0 %77
  %v79 = vmax.f32 %v35, %v36
  %80 = vmax.xlane.f32.xlu0 %v79
  %v81 = vpop.xlane.xlu0 %80
  %v82 = vmax.f32 %v37, %v38
  %83 = vmax.xlane.f32.xlu0 %v82
  %v84 = vpop.xlane.xlu0 %83
  %v85 = vmax.f32 %v39, %v40
  %86 = vmax.xlane.f32.xlu0 %v85
  %v87 = vpop.xlane.xlu0 %86
  %v88 = vmax.f32 %v41, %v42
  %89 = vmax.xlane.f32.xlu0 %v88
  %v90 = vpop.xlane.xlu0 %89
  %v91 = vsub.f32 %v11, %v45
  %v92 = vsub.f32 %v12, %v45
  %v93 = vsub.f32 %v13, %v48
  %v94 = vsub.f32 %v14, %v48
  %v95 = vsub.f32 %v15, %v51
  %v96 = vsub.f32 %v16, %v51
  %v97 = vsub.f32 %v17, %v54
  %v98 = vsub.f32 %v18, %v54
  %v99 = vsub.f32 %v19, %v57
  %v100 = vsub.f32 %v20, %v57
  %v101 = vsub.f32 %v21, %v60
  %v102 = vsub.f32 %v22, %v60
  %v103 = vsub.f32 %v23, %v63
  %v104 = vsub.f32 %v24, %v63
  %v105 = vsub.f32 %v25, %v66
  %v106 = vsub.f32 %v26, %v66
  %v107 = vsub.f32 %v27, %v69
  %v108 = vsub.f32 %v28, %v69
  %v109 = vsub.f32 %v29, %v72
  %v110 = vsub.f32 %v30, %v72
  %v111 = vsub.f32 %v31, %v75
  %v112 = vsub.f32 %v32, %v75
  %v113 = vsub.f32 %v33, %v78
  %v114 = vsub.f32 %v34, %v78
  %v115 = vsub.f32 %v35, %v81
  %v116 = vsub.f32 %v36, %v81
  %v117 = vsub.f32 %v37, %v84
  %v118 = vsub.f32 %v38, %v84
  %v119 = vsub.f32 %v39, %v87
  %v120 = vsub.f32 %v40, %v87
  %v121 = vsub.f32 %v41, %v90
  %v122 = vsub.f32 %v42, %v90
  %v123 = vmul.f32 %v91, 1.442695
  %v124 = vpow.pop %v123
  %v125 = vmul.f32 %v92, 1.442695
  %v126 = vpow.pop %v125
  %v127 = vmul.f32 %v93, 1.442695
  %v128 = vpow.pop %v127
  %v129 = vmul.f32 %v94, 1.442695
  %v130 = vpow.pop %v129
  %v131 = vmul.f32 %v95, 1.442695
  %v132 = vpow.pop %v131
  %v133 = vmul.f32 %v96, 1.442695
  %v134 = vpow.pop %v133
  %v135 = vmul.f32 %v97, 1.442695
  %v136 = vpow.pop %v135
  %v137 = vmul.f32 %v98, 1.442695
  %v138 = vpow.pop %v137
  %v139 = vmul.f32 %v99, 1.442695
  %v140 = vpow.pop %v139
  %v141 = vmul.f32 %v100, 1.442695
  %v142 = vpow.pop %v141
  %v143 = vmul.f32 %v101, 1.442695
  %v144 = vpow.pop %v143
  %v145 = vmul.f32 %v102, 1.442695
  %v146 = vpow.pop %v145
  %v147 = vmul.f32 %v103, 1.442695
  %v148 = vpow.pop %v147
  %v149 = vmul.f32 %v104, 1.442695
  %v150 = vpow.pop %v149
  %v151 = vmul.f32 %v105, 1.442695
  %v152 = vpow.pop %v151
  %v153 = vmul.f32 %v106, 1.442695
  %v154 = vpow.pop %v153
  %v155 = vmul.f32 %v107, 1.442695
  %v156 = vpow.pop %v155
  %v157 = vmul.f32 %v108, 1.442695
  %v158 = vpow.pop %v157
  %v159 = vmul.f32 %v109, 1.442695
  %v160 = vpow.pop %v159
  %v161 = vmul.f32 %v110, 1.442695
  %v162 = vpow.pop %v161
  %v163 = vmul.f32 %v111, 1.442695
  %v164 = vpow.pop %v163
  %v165 = vmul.f32 %v112, 1.442695
  %v166 = vpow.pop %v165
  %v167 = vmul.f32 %v113, 1.442695
  %v168 = vpow.pop %v167
  %v169 = vmul.f32 %v114, 1.442695
  %v170 = vpow.pop %v169
  %v171 = vmul.f32 %v115, 1.442695
  %v172 = vpow.pop %v171
  %v173 = vmul.f32 %v116, 1.442695
  %v174 = vpow.pop %v173
  %v175 = vmul.f32 %v117, 1.442695
  %v176 = vpow.pop %v175
  %v177 = vmul.f32 %v118, 1.442695
  %v178 = vpow.pop %v177
  %v179 = vmul.f32 %v119, 1.442695
  %v180 = vpow.pop %v179
  %v181 = vmul.f32 %v120, 1.442695
  %v182 = vpow.pop %v181
  %v183 = vmul.f32 %v121, 1.442695
  %v184 = vpow.pop %v183
  %v185 = vmul.f32 %v122, 1.442695
  %v186 = vpow.pop %v185
  %v187 = vld [vmem:[%s1] sm:$0xff]
  %v188 = vld [vmem:[%s1 + $0x8] sm:$0xff]
  %189 = vmatprep.subr.mxu0 %v126
  %190 = vmatpush1.xpose.msra.mxu0 %v124
  %191 = vmatprep.subr.mxu0 %v130
  %192 = vmatpush1.xpose.msra.mxu0 %v128
  %193 = vmatprep.subr.mxu0 %v134
  %194 = vmatpush1.xpose.msra.mxu0 %v132
  %195 = vmatprep.subr.mxu0 %v138
  %196 = vmatpush1.xpose.msra.mxu0 %v136
  %197 = vmatprep.subr.mxu0 %v142
  %198 = vmatpush1.xpose.msra.mxu0 %v140
  %199 = vmatprep.subr.mxu0 %v146
  %200 = vmatpush1.xpose.msra.mxu0 %v144
  %201 = vmatprep.subr.mxu0 %v150
  %202 = vmatpush1.xpose.msra.mxu0 %v148
  %203 = vmatprep.subr.mxu0 %v154
  %204 = vmatpush1.xpose.msra.mxu0 %v152
  %205 = vmatprep.subr.mxu0 %v158
  %206 = vmatpush1.xpose.msra.mxu0 %v156
  %207 = vmatprep.subr.mxu0 %v162
  %208 = vmatpush1.xpose.msra.mxu0 %v160
  %209 = vmatprep.subr.mxu0 %v166
  %210 = vmatpush1.xpose.msra.mxu0 %v164
  %211 = vmatprep.subr.mxu0 %v170
  %212 = vmatpush1.xpose.msra.mxu0 %v168
  %213 = vmatprep.subr.mxu0 %v174
  %214 = vmatpush1.xpose.msra.mxu0 %v172
  %215 = vmatprep.subr.mxu0 %v178
  %216 = vmatpush1.xpose.msra.mxu0 %v176
  %217 = vmatprep.subr.mxu0 %v182
  %218 = vmatpush1.xpose.msra.mxu0 %v180
  %219 = vmatprep.subr.mxu0 %v186
  %220 = vmatpush1.xpose.msra.mxu0 %v184
  %221 = vmatprep.subr.mxu0 0.0
  %222 = vmatpush1.xpose.msra.mxu0 0.0
  %223 = vmatprep.subr.mxu0 0.0
  %224 = vmatpush1.xpose.msra.mxu0 0.0
  %225 = vmatprep.subr.mxu0 0.0
  %226 = vmatpush1.xpose.msra.mxu0 0.0
  %227 = vmatprep.subr.mxu0 0.0
  %228 = vmatpush1.xpose.msra.mxu0 0.0
  %229 = vmatprep.subr.mxu0 0.0
  %230 = vmatpush1.xpose.msra.mxu0 0.0
  %231 = vmatprep.subr.mxu0 0.0
  %232 = vmatpush1.xpose.msra.mxu0 0.0
  %233 = vmatprep.subr.mxu0 0.0
  %234 = vmatpush1.xpose.msra.mxu0 0.0
  %235 = vmatprep.subr.mxu0 0.0
  %236 = vmatpush1.xpose.msra.mxu0 0.0
  %237 = vmatprep.subr.mxu0 0.0
  %238 = vmatpush1.xpose.msra.mxu0 0.0
  %239 = vmatprep.subr.mxu0 0.0
  %240 = vmatpush1.xpose.msra.mxu0 0.0
  %241 = vmatprep.subr.mxu0 0.0
  %242 = vmatpush1.xpose.msra.mxu0 0.0
  %243 = vmatprep.subr.mxu0 0.0
  %244 = vmatpush1.xpose.msra.mxu0 0.0
  %245 = vmatprep.subr.mxu0 0.0
  %246 = vmatpush1.xpose.msra.mxu0 0.0
  %247 = vmatprep.subr.mxu0 0.0
  %248 = vmatpush1.xpose.msra.mxu0 0.0
  %249 = vmatprep.subr.mxu0 0.0
  %250 = vmatpush1.xpose.msra.mxu0 0.0
  %251 = vmatprep.subr.mxu0 0.0
  %252 = vmatpush1.xpose.msra.mxu0 0.0
  %253 = vmatprep.mubr.f32.mxu0 %v188
  %254 = vmatmul.mubr.f32.gmra.mrb[0].mxu0 %v187
  %v255 = vpop.f32.mrb[0].mxu0
  %v256 = vadd.f32 0.0, %v255
  %v257 = vpop.f32.mrb[0].mxu0
  %258 = vdwg.mxu0
  %v259 = vrcp.pop %v256
  %v260 = vlaneseq
  %v261 = vshrl.u32 %v260, 7
  %v262 = vsub.s32 2, %v261
  %v263 = vrot.slane %v259, %v262
  %v264 = vmul.f32 %v256, %v263
  %265 = vst [vmem:[%s2] sm:$0xff] %v264
  // Predicated region
  $region10: #{spatial_soft_argmax.1} parent=0 // pred_check
    _
  $region11: #{spatial_soft_argmax.1} parent=0 // pred_check_branch
    %267 = sbr.rel (0) target = $region13
  $region12: #{spatial_soft_argmax.1} parent=0 // pred_region
    _
  $region13: #{spatial_soft_argmax.1} parent=0 // pred_fallthru
    _
  // Predicated region
  $region14: #{spatial_soft_argmax.1} parent=0 // pred_check
    _
  $region15: #{spatial_soft_argmax.1} parent=0 // pred_check_branch
    %269 = sbr.rel (0) target = $region17
  $region16: #{spatial_soft_argmax.1} parent=0 // pred_region
    _
  $region17: #{spatial_soft_argmax.1} parent=0 // pred_fallthru
    _

</llo_original>
